<compile_context>
chip_gen: v5e
topology: v5e:2x2
jax: 0.10.0
libtpu: 0.0.40
codegen_flags: <defaults>
</compile_context>

<pallas_src>
import math

import jax
import jax.numpy as jnp
from jax import lax
from jax.experimental import pallas as pl
from jax.experimental.pallas import tpu as pltpu


# ----------------------------------------------------------------------------
# Pallas kernel 1: fusion (+global, relu) + 1x1 conv_out over the low-res grid
# Batch is folded into the lane axis -> one grid step, lane-dense store.
# ----------------------------------------------------------------------------
def fusion_conv_out(local_lane, global_lane, w_out, b_out):
    """relu(local + global) then 1x1 conv_out, batch folded into lanes.

    local_lane : (C_in, N*PG)   PG = sb*sb
    global_lane: (C_in, N*PG)   (global features pre-broadcast over PG)
    w_out      : (C_out, C_in)
    b_out      : (C_out, 1)
    returns    : (C_out, N*PG)  bfloat16 (bilateral grid, fed to the slice matmul)
    """
    C_in, L = local_lane.shape
    C_out = w_out.shape[0]

    def kernel(l_ref, g_ref, w_ref, b_ref, o_ref):
        fused = jnp.maximum(l_ref[...] + g_ref[...], 0.0)            # (C_in, L)
        acc = jnp.dot(w_ref[...], fused,
                      preferred_element_type=jnp.float32) + b_ref[...]
        o_ref[...] = acc.astype(o_ref.dtype)                         # (C_out, L)

    return pl.pallas_call(
        kernel,
        out_shape=jax.ShapeDtypeStruct((C_out, L), jnp.bfloat16),
    )(local_lane, global_lane, w_out, b_out)


# ----------------------------------------------------------------------------
# Pallas kernel 2: fused GuideNN + factored trilinear Slice + ApplyCoeffs
# ----------------------------------------------------------------------------
def fused_render(fullres_flat, wy_full, wx_full, grid_bf16, w1, b1, w2t, b2,
                 *, GD, GH, GW, TP):
    """Per-pixel full-res path.

    fullres_flat: (N, 3, P)          P = H*W
    wy_full     : (GH, P)  f32       precomputed y tent weights (geometry only)
    wx_full     : (GW, P)  f32       precomputed x tent weights (geometry only)
    grid_bf16   : (N, 12*GD, GH*GW)  bilateral grid, rows = c*GD + z, cols = y*GW + x
    w1 (16,3), b1 (16,1): guide conv1 with eval-BN folded in
    w2t (16,1), b2 (1,1): guide conv2 (transposed weight)
    returns     : (N, 3, P) f32
    """
    N, _, P = fullres_flat.shape
    assert P % TP == 0 and TP % 128 == 0
    CG, ZYX = grid_bf16.shape[1], grid_bf16.shape[2]     # 96, GH*GW
    C = CG // GD                                         # nin*nout = 12
    HID = w1.shape[0]                                    # 16 guide hidden channels

    def kernel(x_ref, wy_ref, wx_ref, g_ref, w1_ref, b1_ref, w2_ref, b2_ref, o_ref):
        x = x_ref[...]                                               # (3, TP)
        # --- GuideNN: two 1x1 convs (pointwise); conv1 BN folded into w1/b1 ---
        h = (w1_ref[:, 0:1] * x[0:1, :]
             + w1_ref[:, 1:2] * x[1:2, :]
             + w1_ref[:, 2:3] * x[2:3, :]
             + b1_ref[...])                                          # (HID, TP)
        h = jnp.maximum(h, 0.0)
        guide = jnp.tanh(jnp.sum(w2_ref[...] * h, axis=0, keepdims=True)
                         + b2_ref[...])                              # (1, TP) in [-1,1]
        # --- z tent weights (the only data-dependent part of the slice) ---
        # align_corners=False unnormalization of the guide z coordinate.
        iz = ((guide + 1.0) * GD - 1.0) * 0.5                        # (1, TP)
        kz = lax.broadcasted_iota(jnp.int32, (GD, 1), 0).astype(jnp.float32)
        wz = jnp.maximum(1.0 - jnp.abs(iz - kz), 0.0)                # (GD, TP)
        # --- spatial tent-weight outer product from precomputed wy/wx ---
        wxy = (wy_ref[...][:, None, :] * wx_ref[...][None, :, :]
               ).reshape(GH * GW, TP)                                # (GH*GW, TP)
        # --- factored Slice: spatial contraction on MXU (bf16 ops, f32 acc) ---
        partial = jnp.dot(g_ref[...], wxy.astype(jnp.bfloat16),
                          preferred_element_type=jnp.float32)        # (C*GD, TP)
        # --- z contraction: VPU multiply + per-channel sublane reduce ---
        coeff = jnp.sum(partial.reshape(C, GD, TP) * wz[None, :, :], axis=1)  # (C, TP)
        # --- ApplyCoeffs: per-pixel affine, explicit FMAs, single store ---
        r = (x[0:1, :] * coeff[0:1, :] + x[1:2, :] * coeff[1:2, :]
             + x[2:3, :] * coeff[2:3, :] + coeff[3:4, :])
        g = (x[0:1, :] * coeff[4:5, :] + x[1:2, :] * coeff[5:6, :]
             + x[2:3, :] * coeff[6:7, :] + coeff[7:8, :])
        b = (x[0:1, :] * coeff[8:9, :] + x[1:2, :] * coeff[9:10, :]
             + x[2:3, :] * coeff[10:11, :] + coeff[11:12, :])
        o_ref[...] = jnp.concatenate([r, g, b], axis=0).astype(o_ref.dtype)

    grid_spec = pltpu.PrefetchScalarGridSpec(
        num_scalar_prefetch=0,
        grid=(N, P // TP),
        in_specs=[
            pl.BlockSpec((pl.Squeezed(), 3, TP), lambda n, t: (n, 0, t)),
            pl.BlockSpec((GH, TP), lambda n, t: (0, t)),
            pl.BlockSpec((GW, TP), lambda n, t: (0, t)),
            pl.BlockSpec((pl.Squeezed(), CG, ZYX), lambda n, t: (n, 0, 0)),
            pl.BlockSpec((HID, 3), lambda n, t: (0, 0)),
            pl.BlockSpec((HID, 1), lambda n, t: (0, 0)),
            pl.BlockSpec((HID, 1), lambda n, t: (0, 0)),
            pl.BlockSpec((1, 1), lambda n, t: (0, 0)),
        ],
        out_specs=pl.BlockSpec((pl.Squeezed(), 3, TP), lambda n, t: (n, 0, t)),
    )
    return pl.pallas_call(
        kernel,
        out_shape=jax.ShapeDtypeStruct((N, 3, P), jnp.float32),
        grid_spec=grid_spec,
        compiler_params=pltpu.CompilerParams(
            dimension_semantics=("parallel", "parallel"),
            # working set is ~5 MiB/tile at TP=2048; 32 MiB is safe on every
            # generation (incl. v7x's 64 MiB per-TC VMEM) with pipeline headroom.
            vmem_limit_bytes=32 * 1024 * 1024),
    )(fullres_flat, wy_full, wx_full, grid_bf16, w1, b1, w2t, b2)


# ----------------------------------------------------------------------------
# Plain-JAX glue: the low-res Coeffs backbone (convs / FCs / eval BatchNorm)
# ----------------------------------------------------------------------------
def conv2d(x, w, b, stride, padding):
    y = lax.conv_general_dilated(
        x, w, (stride, stride),
        [(padding, padding), (padding, padding)],
        dimension_numbers=("NCHW", "OIHW", "NCHW"))
    if b is not None:
        y = y + b[None, :, None, None]
    return y


def bn_eval(x, bn):
    gamma, beta, mean, var = bn
    scale = gamma / jnp.sqrt(var + 1e-5)
    shift = beta - mean * scale
    if x.ndim == 4:
        return x * scale[None, :, None, None] + shift[None, :, None, None]
    return x * scale[None, :] + shift[None, :]


def conv_block(x, p):
    y = conv2d(x, p["w"], p["b"], p["stride"], p["padding"])
    if p["bn"] is not None:
        y = bn_eval(y, p["bn"])
    if p["relu"]:
        y = jnp.maximum(y, 0.0)
    return y


def fc_block(x, p):
    y = x @ p["w"].T + p["b"]
    if p["bn"] is not None:
        y = bn_eval(y, p["bn"])
    if p["relu"]:
        y = jnp.maximum(y, 0.0)
    return y


# ----------------------------------------------------------------------------
# Deterministic parameter construction (mirrors the module __init__ shapes)
# ----------------------------------------------------------------------------
def _init_conv(key, outc, inc, k, bias=True):
    kw, kb = jax.random.split(key)
    w = jax.random.normal(kw, (outc, inc, k, k), jnp.float32) / math.sqrt(inc * k * k)
    b = 0.05 * jax.random.normal(kb, (outc,), jnp.float32) if bias else None
    return w, b


def _init_fc(key, outc, inc):
    kw, kb = jax.random.split(key)
    w = jax.random.normal(kw, (outc, inc), jnp.float32) / math.sqrt(inc)
    b = 0.05 * jax.random.normal(kb, (outc,), jnp.float32)
    return w, b


def _init_bn(key, c):
    k1, k2, k3, k4 = jax.random.split(key, 4)
    gamma = 1.0 + 0.1 * jax.random.normal(k1, (c,), jnp.float32)
    beta = 0.1 * jax.random.normal(k2, (c,), jnp.float32)
    mean = 0.1 * jax.random.normal(k3, (c,), jnp.float32)
    var = 1.0 + 0.1 * jnp.abs(jax.random.normal(k4, (c,), jnp.float32))
    return gamma, beta, mean, var


def build_params(key, *, nin, nout, lb, cm, sb, nsize, bn):
    keys = iter(jax.random.split(key, 64))
    params = {}

    # splat path
    n_splat = int(math.log2(nsize / sb))
    splat, prev = [], nin
    for i in range(n_splat):
        outc = cm * (2 ** i) * lb
        w, b = _init_conv(next(keys), outc, prev, 3)
        splat.append(dict(w=w, b=b, stride=2, padding=1,
                          bn=_init_bn(next(keys), outc) if (bn and i > 0) else None,
                          relu=True))
        prev = outc
    splat_ch = prev
    params["splat"] = splat

    # global conv path
    n_global = int(math.log2(sb / 4))
    gconv = []
    for _ in range(n_global):
        outc = cm * 8 * lb
        w, b = _init_conv(next(keys), outc, prev, 3)
        gconv.append(dict(w=w, b=b, stride=2, padding=1,
                          bn=_init_bn(next(keys), outc) if bn else None, relu=True))
        prev = outc
    params["gconv"] = gconv

    # global FC path
    n_total = n_splat + n_global
    fc_in = int(prev * (nsize / 2 ** n_total) ** 2)
    gfc = []
    for inc, outc, relu in [(fc_in, 32 * cm * lb, True),
                            (32 * cm * lb, 16 * cm * lb, True),
                            (16 * cm * lb, 8 * cm * lb, False)]:
        w, b = _init_fc(next(keys), outc, inc)
        gfc.append(dict(w=w, b=b, bn=_init_bn(next(keys), outc) if bn else None,
                        relu=relu))
    params["gfc"] = gfc

    # local path
    local = []
    w, b = _init_conv(next(keys), 8 * cm * lb, splat_ch, 3)
    local.append(dict(w=w, b=b, stride=1, padding=1,
                      bn=_init_bn(next(keys), 8 * cm * lb) if bn else None, relu=True))
    w, _ = _init_conv(next(keys), 8 * cm * lb, 8 * cm * lb, 3, bias=False)
    local.append(dict(w=w, b=None, stride=1, padding=1, bn=None, relu=False))
    params["local"] = local

    # conv_out (1x1)
    w, b = _init_conv(next(keys), lb * nout * nin, 8 * cm * lb, 1)
    params["conv_out"] = dict(w2d=w.reshape(lb * nout * nin, 8 * cm * lb),
                              b2d=b.reshape(lb * nout * nin, 1))

    # GuideNN (conv1: 3->16 with BN folded; conv2: 16->1 tanh)
    w1, b1 = _init_conv(next(keys), 16, 3, 1)
    g_gamma, g_beta, g_mean, g_var = _init_bn(next(keys), 16)
    w2, b2 = _init_conv(next(keys), 1, 16, 1)
    scale = g_gamma / jnp.sqrt(g_var + 1e-5)
    params["guide"] = dict(
        w1=(w1.reshape(16, 3) * scale[:, None]).astype(jnp.float32),
        b1=(((b1 - g_mean) * scale + g_beta).reshape(16, 1)).astype(jnp.float32),
        w2t=w2.reshape(1, 16).T.astype(jnp.float32),
        b2=b2.reshape(1, 1).astype(jnp.float32))
    return params


# ----------------------------------------------------------------------------
# HDRPointwiseNN forward
# ----------------------------------------------------------------------------
def hdr_pointwise_forward(params, lowres, fullres, *, nin, nout, lb, sb, TP=2048):
    N, _, Hf, Wf = fullres.shape
    GD, GH, GW = lb, sb, sb
    CG = nin * nout * lb          # 96 grid rows = (c, z) pairs

    # ---- Coeffs backbone on low-res input (plain JAX glue) ----
    x = lowres
    for p in params["splat"]:
        x = conv_block(x, p)
    splat = x
    for p in params["gconv"]:
        x = conv_block(x, p)
    x = x.reshape(N, -1)
    for p in params["gfc"]:
        x = fc_block(x, p)
    global_features = x                                    # (N, 8*cm*lb)
    x = splat
    for p in params["local"]:
        x = conv_block(x, p)
    local_features = x                                     # (N, 8*cm*lb, sb, sb)

    # ---- fusion + conv_out (Pallas kernel 1), batch folded into lanes ----
    Cl = local_features.shape[1]
    PG = GH * GW
    local_lane = jnp.transpose(local_features.reshape(N, Cl, PG),
                               (1, 0, 2)).reshape(Cl, N * PG)
    glob_lane = jnp.broadcast_to(jnp.transpose(global_features)[:, :, None],
                                 (Cl, N, PG)).reshape(Cl, N * PG)
    grid_lane = fusion_conv_out(local_lane, glob_lane,
                                params["conv_out"]["w2d"],
                                params["conv_out"]["b2d"])            # (96, N*PG) bf16
    # back to (N, 96, sb*sb); row index = c*lb + z, col index = y*sb + x
    grid_bf16 = jnp.transpose(grid_lane.reshape(CG, N, PG), (1, 0, 2))

    # ---- precompute geometry-only spatial tent weights (align_corners=False) ----
    P = Hf * Wf
    TP = min(TP, P)
    assert P % TP == 0 and TP % 128 == 0
    hg = (jnp.arange(Hf, dtype=jnp.float32) / (Hf - 1)) * 2.0 - 1.0
    wg = (jnp.arange(Wf, dtype=jnp.float32) / (Wf - 1)) * 2.0 - 1.0
    iy_row = ((hg + 1.0) * GH - 1.0) * 0.5     # grid-space y coordinate per image row
    ix_col = ((wg + 1.0) * GW - 1.0) * 0.5     # grid-space x coordinate per image col
    ky = jnp.arange(GH, dtype=jnp.float32)
    kx = jnp.arange(GW, dtype=jnp.float32)
    wy_rows = jnp.maximum(1.0 - jnp.abs(iy_row[None, :] - ky[:, None]), 0.0)  # (GH, Hf)
    wx_cols = jnp.maximum(1.0 - jnp.abs(ix_col[None, :] - kx[:, None]), 0.0)  # (GW, Wf)
    # out-of-range tent mass is dropped -> matches grid_sample padding_mode='zeros'
    wy_full = jnp.broadcast_to(wy_rows[:, :, None], (GH, Hf, Wf)).reshape(GH, P)
    wx_full = jnp.broadcast_to(wx_cols[:, None, :], (GW, Hf, Wf)).reshape(GW, P)

    # ---- guide + factored slice + apply (fused Pallas kernel 2) ----
    fullres_flat = fullres.reshape(N, 3, P)
    g = params["guide"]
    out_flat = fused_render(fullres_flat, wy_full, wx_full, grid_bf16,
                            g["w1"], g["b1"], g["w2t"], g["b2"],
                            GD=GD, GH=GH, GW=GW, TP=TP)
    return out_flat.reshape(N, 3, Hf, Wf)


# ----------------------------------------------------------------------------
if __name__ == "__main__":
    key = jax.random.PRNGKey(0)
    k_params, k_low, k_full = jax.random.split(key, 3)

    # Small config: nin=3, nout=4, lb=8, cm=1, sb=16, nsize=64 (lowres 64x64),
    # fullres 64x64, batch 2.  Bilateral grid: (N, 12, 8, 16, 16).
    NIN, NOUT, LB, CM, SB, NSIZE, BN = 3, 4, 8, 1, 16, 64, True
    N, HF, WF = 2, 64, 64

    params = build_params(k_params, nin=NIN, nout=NOUT, lb=LB, cm=CM,
                          sb=SB, nsize=NSIZE, bn=BN)
    lowres = jax.random.uniform(k_low, (N, NIN, NSIZE, NSIZE), jnp.float32)
    fullres = jax.random.uniform(k_full, (N, NIN, HF, WF), jnp.float32)

    out = hdr_pointwise_forward(params, lowres, fullres,
                                nin=NIN, nout=NOUT, lb=LB, sb=SB, TP=2048)
    out = jax.block_until_ready(out)

    assert out.shape == (N, 3, HF, WF), out.shape
    assert bool(jnp.all(jnp.isfinite(out)))
    print("KERNEL_OK")
</pallas_src>

<mosaic_0001>
module attributes {stable_mosaic.version = 11 : i64} {
  func.func @kernel(%arg0: memref<64x512xf32, #tpu.memory_space<vmem>>, %arg1: memref<64x512xf32, #tpu.memory_space<vmem>>, %arg2: memref<96x64xf32, #tpu.memory_space<vmem>>, %arg3: memref<96x1xf32, #tpu.memory_space<vmem>>, %arg4: memref<96x512xbf16, #tpu.memory_space<vmem>>) attributes {dimension_semantics = [], scalar_prefetch = 0 : i64, scratch_operands = 0 : i64, tpu.core_type = #tpu.core_type<tc>} {
    %c0 = arith.constant 0 : index
    %c0_0 = arith.constant 0 : index
    %0 = vector.load %arg0[%c0, %c0_0] : memref<64x512xf32, #tpu.memory_space<vmem>>, vector<64x512xf32>
    %c0_1 = arith.constant 0 : index
    %c0_2 = arith.constant 0 : index
    %1 = vector.load %arg1[%c0_1, %c0_2] : memref<64x512xf32, #tpu.memory_space<vmem>>, vector<64x512xf32>
    %2 = arith.addf %0, %1 : vector<64x512xf32>
    %cst = arith.constant 0.000000e+00 : f32
    %3 = vector.broadcast %cst : f32 to vector<64x512xf32>
    %4 = arith.maximumf %2, %3 : vector<64x512xf32>
    %c0_3 = arith.constant 0 : index
    %c0_4 = arith.constant 0 : index
    %5 = vector.load %arg2[%c0_3, %c0_4] : memref<96x64xf32, #tpu.memory_space<vmem>>, vector<96x64xf32>
    %cst_5 = arith.constant dense<0.000000e+00> : vector<96x512xf32>
    %6 = tpu.matmul %5, %4, %cst_5 {dimension_numbers = #tpu.dot_dimension_numbers<[1], [0], [0], [1], [0, 0, 1, 1], [], []>} : vector<96x64xf32>, vector<64x512xf32>, vector<96x512xf32> -> vector<96x512xf32>
    %c0_6 = arith.constant 0 : index
    %c0_7 = arith.constant 0 : index
    %7 = vector.load %arg3[%c0_6, %c0_7] : memref<96x1xf32, #tpu.memory_space<vmem>>, vector<96x1xf32>
    %8 = vector.broadcast %7 : vector<96x1xf32> to vector<96x512xf32>
    %9 = arith.addf %6, %8 : vector<96x512xf32>
    %10 = arith.truncf %9 : vector<96x512xf32> to vector<96x512xbf16>
    %c0_8 = arith.constant 0 : index
    %c0_9 = arith.constant 0 : index
    %11 = vector.load %arg4[%c0_8, %c0_9] : memref<96x512xbf16, #tpu.memory_space<vmem>>, vector<96x512xbf16>
    tpu.vector_store %arg4[%c0_8, %c0_9], %10 {strides = array<i32>} : memref<96x512xbf16, #tpu.memory_space<vmem>>, vector<96x512xbf16>,
    return
  }
}

</mosaic_0001>

<llo_original>
// kernel: tpu_custom_call.1
$region0: #{tpu_custom_call.1}
  #allocation0 [shape = 'u32[]', space=smem, size = 0x4, offset = 0x4, fixed_abs, tag = 'smem constant byte address 0x4 - core index']
  #allocation1 [shape = 'u32[72,128]{1,0:T(1,128)}', space=vmem, size = 0x9000, scoped, tag = 'internal scratch']
  %s0 = inlined_call_operand.vmem [shape: f32[64,512], index: 0, kind: input, shape index: {}]
  %s1 = inlined_call_operand.hbm [shape: f32[64,512], index: 1, kind: input, shape index: {}]
  %s2 = inlined_call_operand.vmem [shape: f32[96,64], index: 2, kind: input, shape index: {}]
  %s3 = inlined_call_operand.vmem [shape: f32[96,1], index: 3, kind: input, shape index: {}]
  %s4 = inlined_call_operand.hbm [shape: bf16[96,512], index: 4, kind: output, shape index: {}]
  %s5 = sld [smem:[#allocation0]]
  $region30: #{tpu_custom_call.1} parent=0
    _
  %s7 = ssub.s32 1, %s5
  %s8 = scalar_select 0, %s7, %s5
  $region1: #{tpu_custom_call.1} parent=0
    #allocation2 [shape = 'u8[131072]{0}', space=vmem, size = 0x20000, scoped, tag = 'input window, operand 1, single buffered']
    #allocation3 [shape = 's32[1]{0}', space=sflag, size = 0x4, scoped, tag = 'scoped memory for tpu_custom_call.1']
    #allocation4 [shape = 's32[1]{0}', space=sflag, size = 0x4, scoped, tag = 'scoped memory for tpu_custom_call.1']
    #allocation5 [shape = 'u8[98304]{0}', space=vmem, size = 0x18000, scoped, tag = 'output window, operand 0, single buffered']
    %9 = vsyncpa [#allocation3], 0
    %10 = vsyncpa [#allocation4], 0
    // Predicated region
    $region2: #{tpu_custom_call.1} parent=1 // pred_check
      _
    $region3: #{tpu_custom_call.1} parent=1 // pred_check_branch
      %12 = sbr.rel (0) target = $region5
    $region4: #{tpu_custom_call.1} parent=1 // pred_region
      _
    $region5: #{tpu_custom_call.1} parent=1 // pred_fallthru
      _
    // Predicated region
    $region6: #{tpu_custom_call.1} parent=1 // pred_check
      _
    $region7: #{tpu_custom_call.1} parent=1 // pred_check_branch
      %14 = sbr.rel (0) target = $region9
    $region8: #{tpu_custom_call.1} parent=1 // pred_region
      %16 = vsyncadd [#allocation3], 0
      %s17 = sshll.u32 %s1, 4
      %s18 = int_to_ptr.hbm [resolvable:$true] %s17
      %s19 = sshll.u32 [#allocation2], 4
      %s20 = int_to_ptr.vmem [resolvable:$true] %s19
      %25 = dma.hbm_to_vmem [thread:$0]  %s18, 4096, %s20, [#allocation3], 512, 512, 32
    $region9: #{tpu_custom_call.1} parent=1 // pred_fallthru
      _
    // Predicated region
    $region10: #{tpu_custom_call.1} parent=1 // pred_check
      _
    $region11: #{tpu_custom_call.1} parent=1 // pred_check_branch
      %27 = sbr.rel (0) target = $region13
    $region12: #{tpu_custom_call.1} parent=1 // pred_region
      _
    $region13: #{tpu_custom_call.1} parent=1 // pred_fallthru
      _
    // Predicated region
    $region14: #{tpu_custom_call.1} parent=1 // pred_check
      _
    $region15: #{tpu_custom_call.1} parent=1 // pred_check_branch
      %29 = sbr.rel (0) target = $region17
    $region16: #{tpu_custom_call.1} parent=1 // pred_region
      _
    $region17: #{tpu_custom_call.1} parent=1 // pred_fallthru
      _
    // Predicated region
    $region18: #{tpu_custom_call.1} parent=1 // pred_check
      _
    $region19: #{tpu_custom_call.1} parent=1 // pred_check_branch
      %31 = sbr.rel (0) target = $region21
    $region20: #{tpu_custom_call.1} parent=1 // pred_region
      %33 = dma.done [#allocation3], 4096
    $region21: #{tpu_custom_call.1} parent=1 // pred_fallthru
      _
    %v34 = vld [vmem:[%s0] sm:$0xff]
    %v35 = vld [vmem:[%s0 + $0x8] sm:$0xff]
    %v36 = vld [vmem:[%s0 + $0x10] sm:$0xff]
    %v37 = vld [vmem:[%s0 + $0x18] sm:$0xff]
    %v38 = vld [vmem:[%s0 + $0x20] sm:$0xff]
    %v39 = vld [vmem:[%s0 + $0x28] sm:$0xff]
    %v40 = vld [vmem:[%s0 + $0x30] sm:$0xff]
    %v41 = vld [vmem:[%s0 + $0x38] sm:$0xff]
    %v42 = vld [vmem:[%s0 + $0x40] sm:$0xff]
    %v43 = vld [vmem:[%s0 + $0x48] sm:$0xff]
    %v44 = vld [vmem:[%s0 + $0x50] sm:$0xff]
    %v45 = vld [vmem:[%s0 + $0x58] sm:$0xff]
    %v46 = vld [vmem:[%s0 + $0x60] sm:$0xff]
    %v47 = vld [vmem:[%s0 + $0x68] sm:$0xff]
    %v48 = vld [vmem:[%s0 + $0x70] sm:$0xff]
    %v49 = vld [vmem:[%s0 + $0x78] sm:$0xff]
    %v50 = vld [vmem:[%s0 + $0x80] sm:$0xff]
    %v51 = vld [vmem:[%s0 + $0x88] sm:$0xff]
    %v52 = vld [vmem:[%s0 + $0x90] sm:$0xff]
    %v53 = vld [vmem:[%s0 + $0x98] sm:$0xff]
    %v54 = vld [vmem:[%s0 + $0xa0] sm:$0xff]
    %v55 = vld [vmem:[%s0 + $0xa8] sm:$0xff]
    %v56 = vld [vmem:[%s0 + $0xb0] sm:$0xff]
    %v57 = vld [vmem:[%s0 + $0xb8] sm:$0xff]
    %v58 = vld [vmem:[%s0 + $0xc0] sm:$0xff]
    %v59 = vld [vmem:[%s0 + $0xc8] sm:$0xff]
    %v60 = vld [vmem:[%s0 + $0xd0] sm:$0xff]
    %v61 = vld [vmem:[%s0 + $0xd8] sm:$0xff]
    %v62 = vld [vmem:[%s0 + $0xe0] sm:$0xff]
    %v63 = vld [vmem:[%s0 + $0xe8] sm:$0xff]
    %v64 = vld [vmem:[%s0 + $0xf0] sm:$0xff]
    %v65 = vld [vmem:[%s0 + $0xf8] sm:$0xff]
    %v66 = vld [vmem:[#allocation2] sm:$0xff]
    %v67 = vld [vmem:[#allocation2 + $0x8] sm:$0xff]
    %v68 = vld [vmem:[#allocation2 + $0x10] sm:$0xff]
    %v69 = vld [vmem:[#allocation2 + $0x18] sm:$0xff]
    %v70 = vld [vmem:[#allocation2 + $0x20] sm:$0xff]
    %v71 = vld [vmem:[#allocation2 + $0x28] sm:$0xff]
    %v72 = vld [vmem:[#allocation2 + $0x30] sm:$0xff]
    %v73 = vld [vmem:[#allocation2 + $0x38] sm:$0xff]
    %v74 = vld [vmem:[#allocation2 + $0x40] sm:$0xff]
    %v75 = vld [vmem:[#allocation2 + $0x48] sm:$0xff]
    %v76 = vld [vmem:[#allocation2 + $0x50] sm:$0xff]
    %v77 = vld [vmem:[#allocation2 + $0x58] sm:$0xff]
    %v78 = vld [vmem:[#allocation2 + $0x60] sm:$0xff]
    %v79 = vld [vmem:[#allocation2 + $0x68] sm:$0xff]
    %v80 = vld [vmem:[#allocation2 + $0x70] sm:$0xff]
    %v81 = vld [vmem:[#allocation2 + $0x78] sm:$0xff]
    %v82 = vld [vmem:[#allocation2 + $0x80] sm:$0xff]
    %v83 = vld [vmem:[#allocation2 + $0x88] sm:$0xff]
    %v84 = vld [vmem:[#allocation2 + $0x90] sm:$0xff]
    %v85 = vld [vmem:[#allocation2 + $0x98] sm:$0xff]
    %v86 = vld [vmem:[#allocation2 + $0xa0] sm:$0xff]
    %v87 = vld [vmem:[#allocation2 + $0xa8] sm:$0xff]
    %v88 = vld [vmem:[#allocation2 + $0xb0] sm:$0xff]
    %v89 = vld [vmem:[#allocation2 + $0xb8] sm:$0xff]
    %v90 = vld [vmem:[#allocation2 + $0xc0] sm:$0xff]
    %v91 = vld [vmem:[#allocation2 + $0xc8] sm:$0xff]
    %v92 = vld [vmem:[#allocation2 + $0xd0] sm:$0xff]
    %v93 = vld [vmem:[#allocation2 + $0xd8] sm:$0xff]
    %v94 = vld [vmem:[#allocation2 + $0xe0] sm:$0xff]
    %v95 = vld [vmem:[#allocation2 + $0xe8] sm:$0xff]
    %v96 = vld [vmem:[#allocation2 + $0xf0] sm:$0xff]
    %v97 = vld [vmem:[#allocation2 + $0xf8] sm:$0xff]
    %v98 = vadd.f32 %v34, %v66
    %v99 = vadd.f32 %v35, %v67
    %v100 = vadd.f32 %v36, %v68
    %v101 = vadd.f32 %v37, %v69
    %v102 = vadd.f32 %v38, %v70
    %v103 = vadd.f32 %v39, %v71
    %v104 = vadd.f32 %v40, %v72
    %v105 = vadd.f32 %v41, %v73
    %v106 = vadd.f32 %v42, %v74
    %v107 = vadd.f32 %v43, %v75
    %v108 = vadd.f32 %v44, %v76
    %v109 = vadd.f32 %v45, %v77
    %v110 = vadd.f32 %v46, %v78
    %v111 = vadd.f32 %v47, %v79
    %v112 = vadd.f32 %v48, %v80
    %v113 = vadd.f32 %v49, %v81
    %v114 = vadd.f32 %v50, %v82
    %v115 = vadd.f32 %v51, %v83
    %v116 = vadd.f32 %v52, %v84
    %v117 = vadd.f32 %v53, %v85
    %v118 = vadd.f32 %v54, %v86
    %v119 = vadd.f32 %v55, %v87
    %v120 = vadd.f32 %v56, %v88
    %v121 = vadd.f32 %v57, %v89
    %v122 = vadd.f32 %v58, %v90
    %v123 = vadd.f32 %v59, %v91
    %v124 = vadd.f32 %v60, %v92
    %v125 = vadd.f32 %v61, %v93
    %v126 = vadd.f32 %v62, %v94
    %v127 = vadd.f32 %v63, %v95
    %v128 = vadd.f32 %v64, %v96
    %v129 = vadd.f32 %v65, %v97
    %v130 = vmax.f32 %v98, 0.0
    %v131 = vmax.f32 %v99, 0.0
    %v132 = vmax.f32 %v100, 0.0
    %v133 = vmax.f32 %v101, 0.0
    %v134 = vmax.f32 %v102, 0.0
    %v135 = vmax.f32 %v103, 0.0
    %v136 = vmax.f32 %v104, 0.0
    %v137 = vmax.f32 %v105, 0.0
    %v138 = vmax.f32 %v106, 0.0
    %v139 = vmax.f32 %v107, 0.0
    %v140 = vmax.f32 %v108, 0.0
    %v141 = vmax.f32 %v109, 0.0
    %v142 = vmax.f32 %v110, 0.0
    %v143 = vmax.f32 %v111, 0.0
    %v144 = vmax.f32 %v112, 0.0
    %v145 = vmax.f32 %v113, 0.0
    %v146 = vmax.f32 %v114, 0.0
    %v147 = vmax.f32 %v115, 0.0
    %v148 = vmax.f32 %v116, 0.0
    %v149 = vmax.f32 %v117, 0.0
    %v150 = vmax.f32 %v118, 0.0
    %v151 = vmax.f32 %v119, 0.0
    %v152 = vmax.f32 %v120, 0.0
    %v153 = vmax.f32 %v121, 0.0
    %v154 = vmax.f32 %v122, 0.0
    %v155 = vmax.f32 %v123, 0.0
    %v156 = vmax.f32 %v124, 0.0
    %v157 = vmax.f32 %v125, 0.0
    %v158 = vmax.f32 %v126, 0.0
    %v159 = vmax.f32 %v127, 0.0
    %v160 = vmax.f32 %v128, 0.0
    %v161 = vmax.f32 %v129, 0.0
    %v162 = vld [vmem:[%s2] sm:$0xff]
    %v163 = vld [vmem:[%s2 + $0x8] sm:$0xff]
    %v164 = vld [vmem:[%s2 + $0x10] sm:$0xff]
    %v165 = vld [vmem:[%s2 + $0x18] sm:$0xff]
    %v166 = vld [vmem:[%s2 + $0x20] sm:$0xff]
    %v167 = vld [vmem:[%s2 + $0x28] sm:$0xff]
    %v168 = vld [vmem:[%s2 + $0x30] sm:$0xff]
    %v169 = vld [vmem:[%s2 + $0x38] sm:$0xff]
    %v170 = vld [vmem:[%s2 + $0x40] sm:$0xff]
    %v171 = vld [vmem:[%s2 + $0x48] sm:$0xff]
    %v172 = vld [vmem:[%s2 + $0x50] sm:$0xff]
    %v173 = vld [vmem:[%s2 + $0x58] sm:$0xff]
    %v174 = vld [vmem:[%s3] sm:$0xff]
    %v175 = vld [vmem:[%s3 + $0x8] sm:$0xff]
    %v176 = vld [vmem:[%s3 + $0x10] sm:$0xff]
    %v177 = vld [vmem:[%s3 + $0x18] sm:$0xff]
    %v178 = vld [vmem:[%s3 + $0x20] sm:$0xff]
    %v179 = vld [vmem:[%s3 + $0x28] sm:$0xff]
    %v180 = vld [vmem:[%s3 + $0x30] sm:$0xff]
    %v181 = vld [vmem:[%s3 + $0x38] sm:$0xff]
    %v182 = vld [vmem:[%s3 + $0x40] sm:$0xff]
    %v183 = vld [vmem:[%s3 + $0x48] sm:$0xff]
    %v184 = vld [vmem:[%s3 + $0x50] sm:$0xff]
    %v185 = vld [vmem:[%s3 + $0x58] sm:$0xff]
    %187 = vset.pattern.permute.xlu0 0
    %188 = vperm.xlu0 %187, %v174
    %v189 = vpop.permute.xlu0 %188
    %192 = vset.pattern.permute.xlu0 0
    %193 = vperm.xlu0 %192, %v175
    %v194 = vpop.permute.xlu0 %193
    %197 = vset.pattern.permute.xlu0 0
    %198 = vperm.xlu0 %197, %v176
    %v199 = vpop.permute.xlu0 %198
    %202 = vset.pattern.permute.xlu0 0
    %203 = vperm.xlu0 %202, %v177
    %v204 = vpop.permute.xlu0 %203
    %207 = vset.pattern.permute.xlu0 0
    %208 = vperm.xlu0 %207, %v178
    %v209 = vpop.permute.xlu0 %208
    %212 = vset.pattern.permute.xlu0 0
    %213 = vperm.xlu0 %212, %v179
    %v214 = vpop.permute.xlu0 %213
    %217 = vset.pattern.permute.xlu0 0
    %218 = vperm.xlu0 %217, %v180
    %v219 = vpop.permute.xlu0 %218
    %222 = vset.pattern.permute.xlu0 0
    %223 = vperm.xlu0 %222, %v181
    %v224 = vpop.permute.xlu0 %223
    %227 = vset.pattern.permute.xlu0 0
    %228 = vperm.xlu0 %227, %v182
    %v229 = vpop.permute.xlu0 %228
    %232 = vset.pattern.permute.xlu0 0
    %233 = vperm.xlu0 %232, %v183
    %v234 = vpop.permute.xlu0 %233
    %237 = vset.pattern.permute.xlu0 0
    %238 = vperm.xlu0 %237, %v184
    %v239 = vpop.permute.xlu0 %238
    %242 = vset.pattern.permute.xlu0 0
    %243 = vperm.xlu0 %242, %v185
    %v244 = vpop.permute.xlu0 %243
    %vm246 = vcmask 523264
    %v248 = vsel %vm246, %v162, 0
    %v251 = vsel %vm246, %v163, 0
    %v254 = vsel %vm246, %v164, 0
    %v257 = vsel %vm246, %v165, 0
    %v260 = vsel %vm246, %v166, 0
    %v263 = vsel %vm246, %v167, 0
    %v266 = vsel %vm246, %v168, 0
    %v269 = vsel %vm246, %v169, 0
    %v272 = vsel %vm246, %v170, 0
    %v275 = vsel %vm246, %v171, 0
    %v278 = vsel %vm246, %v172, 0
    %v281 = vsel %vm246, %v173, 0
    %283 = vmatpush.msra.mxu0 0.0
    %284 = vmatpush.msra.mxu0 0.0
    %285 = vmatpush.msra.mxu0 0.0
    %286 = vmatpush.msra.mxu0 0.0
    %287 = vmatpush.msra.mxu0 0.0
    %288 = vmatpush.msra.mxu0 0.0
    %289 = vmatpush.msra.mxu0 0.0
    %290 = vmatpush.msra.mxu0 0.0
    %291 = vmatpush.msra.mxu0 %v158
    %292 = vmatpush.msra.mxu0 %v154
    %293 = vmatpush.msra.mxu0 %v150
    %294 = vmatpush.msra.mxu0 %v146
    %295 = vmatpush.msra.mxu0 %v142
    %296 = vmatpush.msra.mxu0 %v138
    %297 = vmatpush.msra.mxu0 %v134
    %298 = vmatpush.msra.mxu0 %v130
    %299 = vmatmul.f32.gmra.mxu0 %v248
    %v300 = vpop.f32.mrf.mxu0
    %v301 = vadd.f32 %v189, %v300
    %302 = vmatmul.f32.gmra.mxu0 %v251
    %v303 = vpop.f32.mrf.mxu0
    %v304 = vadd.f32 %v194, %v303
    %305 = vmatmul.f32.gmra.mxu0 %v254
    %v306 = vpop.f32.mrf.mxu0
    %v307 = vadd.f32 %v199, %v306
    %308 = vmatmul.f32.gmra.mxu0 %v257
    %v309 = vpop.f32.mrf.mxu0
    %v310 = vadd.f32 %v204, %v309
    %311 = vmatmul.f32.gmra.mxu0 %v260
    %v312 = vpop.f32.mrf.mxu0
    %v313 = vadd.f32 %v209, %v312
    %314 = vmatmul.f32.gmra.mxu0 %v263
    %v315 = vpop.f32.mrf.mxu0
    %v316 = vadd.f32 %v214, %v315
    %317 = vmatmul.f32.gmra.mxu0 %v266
    %v318 = vpop.f32.mrf.mxu0
    %v319 = vadd.f32 %v219, %v318
    %320 = vmatmul.f32.gmra.mxu0 %v269
    %v321 = vpop.f32.mrf.mxu0
    %v322 = vadd.f32 %v224, %v321
    %323 = vmatmul.f32.gmra.mxu0 %v272
    %v324 = vpop.f32.mrf.mxu0
    %v325 = vadd.f32 %v229, %v324
    %326 = vmatmul.f32.gmra.mxu0 %v275
    %v327 = vpop.f32.mrf.mxu0
    %v328 = vadd.f32 %v234, %v327
    %329 = vmatmul.f32.gmra.mxu0 %v278
    %v330 = vpop.f32.mrf.mxu0
    %v331 = vadd.f32 %v239, %v330
    %332 = vmatmul.f32.gmra.mxu0 %v281
    %v333 = vpop.f32.mrf.mxu0
    %v334 = vadd.f32 %v244, %v333
    %335 = vdwg.mxu0
    %336 = vmatpush.msra.mxu0 0.0
    %337 = vmatpush.msra.mxu0 0.0
    %338 = vmatpush.msra.mxu0 0.0
    %339 = vmatpush.msra.mxu0 0.0
    %340 = vmatpush.msra.mxu0 0.0
    %341 = vmatpush.msra.mxu0 0.0
    %342 = vmatpush.msra.mxu0 0.0
    %343 = vmatpush.msra.mxu0 0.0
    %344 = vmatpush.msra.mxu0 %v159
    %345 = vmatpush.msra.mxu0 %v155
    %346 = vmatpush.msra.mxu0 %v151
    %347 = vmatpush.msra.mxu0 %v147
    %348 = vmatpush.msra.mxu0 %v143
    %349 = vmatpush.msra.mxu0 %v139
    %350 = vmatpush.msra.mxu0 %v135
    %351 = vmatpush.msra.mxu0 %v131
    %352 = vmatmul.f32.gmra.mxu0 %v248
    %v353 = vpop.f32.mrf.mxu0
    %v354 = vadd.f32 %v189, %v353
    %355 = vmatmul.f32.gmra.mxu0 %v251
    %v356 = vpop.f32.mrf.mxu0
    %v357 = vadd.f32 %v194, %v356
    %358 = vmatmul.f32.gmra.mxu0 %v254
    %v359 = vpop.f32.mrf.mxu0
    %v360 = vadd.f32 %v199, %v359
    %361 = vmatmul.f32.gmra.mxu0 %v257
    %v362 = vpop.f32.mrf.mxu0
    %v363 = vadd.f32 %v204, %v362
    %364 = vmatmul.f32.gmra.mxu0 %v260
    %v365 = vpop.f32.mrf.mxu0
    %v366 = vadd.f32 %v209, %v365
    %367 = vmatmul.f32.gmra.mxu0 %v263
    %v368 = vpop.f32.mrf.mxu0
    %v369 = vadd.f32 %v214, %v368
    %370 = vmatmul.f32.gmra.mxu0 %v266
    %v371 = vpop.f32.mrf.mxu0
    %v372 = vadd.f32 %v219, %v371
    %373 = vmatmul.f32.gmra.mxu0 %v269
    %v374 = vpop.f32.mrf.mxu0
    %v375 = vadd.f32 %v224, %v374
    %376 = vmatmul.f32.gmra.mxu0 %v272
    %v377 = vpop.f32.mrf.mxu0
    %v378 = vadd.f32 %v229, %v377
    %379 = vmatmul.f32.gmra.mxu0 %v275
    %v380 = vpop.f32.mrf.mxu0
    %v381 = vadd.f32 %v234, %v380
    %382 = vmatmul.f32.gmra.mxu0 %v278
    %v383 = vpop.f32.mrf.mxu0
    %v384 = vadd.f32 %v239, %v383
    %385 = vmatmul.f32.gmra.mxu0 %v281
    %v386 = vpop.f32.mrf.mxu0
    %v387 = vadd.f32 %v244, %v386
    %388 = vdwg.mxu0
    %389 = vmatpush.msra.mxu0 0.0
    %390 = vmatpush.msra.mxu0 0.0
    %391 = vmatpush.msra.mxu0 0.0
    %392 = vmatpush.msra.mxu0 0.0
    %393 = vmatpush.msra.mxu0 0.0
    %394 = vmatpush.msra.mxu0 0.0
    %395 = vmatpush.msra.mxu0 0.0
    %396 = vmatpush.msra.mxu0 0.0
    %397 = vmatpush.msra.mxu0 %v160
    %398 = vmatpush.msra.mxu0 %v156
    %399 = vmatpush.msra.mxu0 %v152
    %400 = vmatpush.msra.mxu0 %v148
    %401 = vmatpush.msra.mxu0 %v144
    %402 = vmatpush.msra.mxu0 %v140
    %403 = vmatpush.msra.mxu0 %v136
    %404 = vmatpush.msra.mxu0 %v132
    %405 = vmatmul.f32.gmra.mxu0 %v248
    %v406 = vpop.f32.mrf.mxu0
    %v407 = vadd.f32 %v189, %v406
    %408 = vmatmul.f32.gmra.mxu0 %v251
    %v409 = vpop.f32.mrf.mxu0
    %v410 = vadd.f32 %v194, %v409
    %411 = vmatmul.f32.gmra.mxu0 %v254
    %v412 = vpop.f32.mrf.mxu0
    %v413 = vadd.f32 %v199, %v412
    %414 = vmatmul.f32.gmra.mxu0 %v257
    %v415 = vpop.f32.mrf.mxu0
    %v416 = vadd.f32 %v204, %v415
    %417 = vmatmul.f32.gmra.mxu0 %v260
    %v418 = vpop.f32.mrf.mxu0
    %v419 = vadd.f32 %v209, %v418
    %420 = vmatmul.f32.gmra.mxu0 %v263
    %v421 = vpop.f32.mrf.mxu0
    %v422 = vadd.f32 %v214, %v421
    %423 = vmatmul.f32.gmra.mxu0 %v266
    %v424 = vpop.f32.mrf.mxu0
    %v425 = vadd.f32 %v219, %v424
    %426 = vmatmul.f32.gmra.mxu0 %v269
    %v427 = vpop.f32.mrf.mxu0
    %v428 = vadd.f32 %v224, %v427
    %429 = vmatmul.f32.gmra.mxu0 %v272
    %v430 = vpop.f32.mrf.mxu0
    %v431 = vadd.f32 %v229, %v430
    %432 = vmatmul.f32.gmra.mxu0 %v275
    %v433 = vpop.f32.mrf.mxu0
    %v434 = vadd.f32 %v234, %v433
    %435 = vmatmul.f32.gmra.mxu0 %v278
    %v436 = vpop.f32.mrf.mxu0
    %v437 = vadd.f32 %v239, %v436
    %438 = vmatmul.f32.gmra.mxu0 %v281
    %v439 = vpop.f32.mrf.mxu0
    %v440 = vadd.f32 %v244, %v439
    %441 = vdwg.mxu0
    %442 = vmatpush.msra.mxu0 0.0
    %443 = vmatpush.msra.mxu0 0.0
    %444 = vmatpush.msra.mxu0 0.0
    %445 = vmatpush.msra.mxu0 0.0
    %446 = vmatpush.msra.mxu0 0.0
    %447 = vmatpush.msra.mxu0 0.0
    %448 = vmatpush.msra.mxu0 0.0
    %449 = vmatpush.msra.mxu0 0.0
    %450 = vmatpush.msra.mxu0 %v161
    %451 = vmatpush.msra.mxu0 %v157
    %452 = vmatpush.msra.mxu0 %v153
    %453 = vmatpush.msra.mxu0 %v149
    %454 = vmatpush.msra.mxu0 %v145
    %455 = vmatpush.msra.mxu0 %v141
    %456 = vmatpush.msra.mxu0 %v137
    %457 = vmatpush.msra.mxu0 %v133
    %458 = vmatmul.f32.gmra.mxu0 %v248
    %v459 = vpop.f32.mrf.mxu0
    %v460 = vadd.f32 %v189, %v459
    %461 = vmatmul.f32.gmra.mxu0 %v251
    %v462 = vpop.f32.mrf.mxu0
    %v463 = vadd.f32 %v194, %v462
    %464 = vmatmul.f32.gmra.mxu0 %v254
    %v465 = vpop.f32.mrf.mxu0
    %v466 = vadd.f32 %v199, %v465
    %467 = vmatmul.f32.gmra.mxu0 %v257
    %v468 = vpop.f32.mrf.mxu0
    %v469 = vadd.f32 %v204, %v468
    %470 = vmatmul.f32.gmra.mxu0 %v260
    %v471 = vpop.f32.mrf.mxu0
    %v472 = vadd.f32 %v209, %v471
    %473 = vmatmul.f32.gmra.mxu0 %v263
    %v474 = vpop.f32.mrf.mxu0
    %v475 = vadd.f32 %v214, %v474
    %476 = vmatmul.f32.gmra.mxu0 %v266
    %v477 = vpop.f32.mrf.mxu0
    %v478 = vadd.f32 %v219, %v477
    %479 = vmatmul.f32.gmra.mxu0 %v269
    %v480 = vpop.f32.mrf.mxu0
    %v481 = vadd.f32 %v224, %v480
    %482 = vmatmul.f32.gmra.mxu0 %v272
    %v483 = vpop.f32.mrf.mxu0
    %v484 = vadd.f32 %v229, %v483
    %485 = vmatmul.f32.gmra.mxu0 %v275
    %v486 = vpop.f32.mrf.mxu0
    %v487 = vadd.f32 %v234, %v486
    %488 = vmatmul.f32.gmra.mxu0 %v278
    %v489 = vpop.f32.mrf.mxu0
    %v490 = vadd.f32 %v239, %v489
    %491 = vmatmul.f32.gmra.mxu0 %v281
    %v492 = vpop.f32.mrf.mxu0
    %v493 = vadd.f32 %v244, %v492
    %494 = vdwg.mxu0
    %v495 = vpack.c.bf16 %v354, %v301
    %v496 = vpack.c.bf16 %v460, %v407
    %v497 = vpack.c.bf16 %v357, %v304
    %v498 = vpack.c.bf16 %v463, %v410
    %v499 = vpack.c.bf16 %v360, %v307
    %v500 = vpack.c.bf16 %v466, %v413
    %v501 = vpack.c.bf16 %v363, %v310
    %v502 = vpack.c.bf16 %v469, %v416
    %v503 = vpack.c.bf16 %v366, %v313
    %v504 = vpack.c.bf16 %v472, %v419
    %v505 = vpack.c.bf16 %v369, %v316
    %v506 = vpack.c.bf16 %v475, %v422
    %v507 = vpack.c.bf16 %v372, %v319
    %v508 = vpack.c.bf16 %v478, %v425
    %v509 = vpack.c.bf16 %v375, %v322
    %v510 = vpack.c.bf16 %v481, %v428
    %v511 = vpack.c.bf16 %v378, %v325
    %v512 = vpack.c.bf16 %v484, %v431
    %v513 = vpack.c.bf16 %v381, %v328
    %v514 = vpack.c.bf16 %v487, %v434
    %v515 = vpack.c.bf16 %v384, %v331
    %v516 = vpack.c.bf16 %v490, %v437
    %v517 = vpack.c.bf16 %v387, %v334
    %v518 = vpack.c.bf16 %v493, %v440
    %519 = vst [vmem:[#allocation5] sm:$0xff] %v495
    %520 = vst [vmem:[#allocation5 + $0x8] sm:$0xff] %v496
    %521 = vst [vmem:[#allocation5 + $0x10] sm:$0xff] %v497
    %522 = vst [vmem:[#allocation5 + $0x18] sm:$0xff] %v498
    %523 = vst [vmem:[#allocation5 + $0x20] sm:$0xff] %v499
    %524 = vst [vmem:[#allocation5 + $0x28] sm:$0xff] %v500
    %525 = vst [vmem:[#allocation5 + $0x30] sm:$0xff] %v501
    %526 = vst [vmem:[#allocation5 + $0x38] sm:$0xff] %v502
    %527 = vst [vmem:[#allocation5 + $0x40] sm:$0xff] %v503
    %528 = vst [vmem:[#allocation5 + $0x48] sm:$0xff] %v504
    %529 = vst [vmem:[#allocation5 + $0x50] sm:$0xff] %v505
    %530 = vst [vmem:[#allocation5 + $0x58] sm:$0xff] %v506
    %531 = vst [vmem:[#allocation5 + $0x60] sm:$0xff] %v507
    %532 = vst [vmem:[#allocation5 + $0x68] sm:$0xff] %v508
    %533 = vst [vmem:[#allocation5 + $0x70] sm:$0xff] %v509
    %534 = vst [vmem:[#allocation5 + $0x78] sm:$0xff] %v510
    %535 = vst [vmem:[#allocation5 + $0x80] sm:$0xff] %v511
    %536 = vst [vmem:[#allocation5 + $0x88] sm:$0xff] %v512
    %537 = vst [vmem:[#allocation5 + $0x90] sm:$0xff] %v513
    %538 = vst [vmem:[#allocation5 + $0x98] sm:$0xff] %v514
    %539 = vst [vmem:[#allocation5 + $0xa0] sm:$0xff] %v515
    %540 = vst [vmem:[#allocation5 + $0xa8] sm:$0xff] %v516
    %541 = vst [vmem:[#allocation5 + $0xb0] sm:$0xff] %v517
    %542 = vst [vmem:[#allocation5 + $0xb8] sm:$0xff] %v518
    // Predicated region
    $region22: #{tpu_custom_call.1} parent=1 // pred_check
      _
    $region23: #{tpu_custom_call.1} parent=1 // pred_check_branch
      %544 = sbr.rel (0) target = $region25
    $region24: #{tpu_custom_call.1} parent=1 // pred_region
      %546 = vsyncadd [#allocation4], 0
      %s547 = sshll.u32 [#allocation5], 4
      %s548 = int_to_ptr.vmem [resolvable:$true] %s547
      %s549 = sshll.u32 %s4, 4
      %s550 = int_to_ptr.hbm [resolvable:$true] %s549
      %555 = dma.vmem_to_hbm [thread:$0]  %s548, 3072, %s550, [#allocation4], 256, 256, 16
    $region25: #{tpu_custom_call.1} parent=1 // pred_fallthru
      _
    // Predicated region
    $region26: #{tpu_custom_call.1} parent=1 // pred_check
      _
    $region27: #{tpu_custom_call.1} parent=1 // pred_check_branch
      %557 = sbr.rel (0) target = $region29
    $region28: #{tpu_custom_call.1} parent=1 // pred_region
      %559 = dma.done [#allocation4], 3072
    $region29: #{tpu_custom_call.1} parent=1 // pred_fallthru
      _
    %560 = vsyncpa [#allocation3], 1
    %561 = vsyncpa [#allocation4], 1

</llo_original>
